<compile_context>
chip_gen: v7x
topology: tpu7x:2x2x1
jax: 0.10.0
libtpu: 0.0.40
codegen_flags: <defaults>
</compile_context>

<pallas_src>
import jax
import jax.numpy as jnp
from jax.experimental import pallas as pl
from jax.experimental.pallas import tpu as pltpu


def attention_kernel(x_ref, w_ref, o_ref):
    # x_ref: (TB, T, D) batch tile of the input (kept in the input dtype)
    # w_ref: (1, D)     shared linear weight (bias omitted: softmax shift-invariant)
    # o_ref: (TB, 1, D) output tile (squeezed to (B, D) outside the kernel)
    x = x_ref[...]                                   # (TB, T, D), input dtype
    w = w_ref[...].astype(x.dtype)                   # (1, D)
    tb, t, d = x.shape

    # scores[b, 0, t] = sum_d w[d] * x[b, t, d]   -- MXU, f32 accumulation
    # (same batched form as a decode-attention q.k contraction with one query)
    wq = jnp.broadcast_to(w[None, :, :], (tb, 1, d))                 # (TB, 1, D)
    scores = jnp.einsum("bod,btd->bot", wq, x,
                        preferred_element_type=jnp.float32)          # (TB, 1, T)

    # softmax over the sequence axis T (lane axis here -> cheap lane reductions)
    m = jnp.max(scores, axis=-1, keepdims=True)                      # (TB, 1, 1)
    e = jnp.exp(scores - m)                                          # (TB, 1, T)
    denom = jnp.sum(e, axis=-1, keepdims=True)                       # (TB, 1, 1)
    weights = e * pl.reciprocal(denom, approx=True)                  # (TB, 1, T)

    # out[b, 0, d] = sum_t weights[b, t] * x[b, t, d]   -- MXU, f32 accumulation
    out = jnp.einsum("bot,btd->bod", weights.astype(x.dtype), x,
                     preferred_element_type=jnp.float32)             # (TB, 1, D)
    o_ref[...] = out.astype(o_ref.dtype)


def _vmem_budget():
    """(vmem_limit_bytes, per-x-block byte budget) for the local TPU generation."""
    mib = 1024 * 1024
    try:
        phys = int(pltpu.get_tpu_info().vmem_capacity_bytes)
    except Exception:
        phys = 64 * mib                      # conservative (v7x-sized) fallback
    # v5e/v6e (128 MiB physical) -> 96 MiB scoped; v7x (64 MiB physical) -> 48 MiB.
    vmem_limit = min((3 * phys) // 4, 96 * mib)
    # x is double-buffered; output/temps are tiny -> ~1/8 of the limit per block
    # keeps the working set well under the requested scoped VMEM on every gen.
    block_budget = max(mib, vmem_limit // 8)
    return vmem_limit, block_budget


def _choose_batch_tile(B, T, D, itemsize, budget_bytes, min_grid_steps=4):
    """Largest batch tile whose x block fits the budget, with >=min_grid_steps steps.

    The (8,128) constraint applies to the last two block dims (T, D), which always
    equal the full array dims here, so TB itself is unconstrained; we keep it a
    multiple of 8 for tidy sublane layouts.
    """
    row_bytes = max(1, T * D * itemsize)
    tb = max(1, int(budget_bytes // row_bytes))
    # Keep the grid at least min_grid_steps deep (when B allows) so double
    # buffering overlaps and both v7x TensorCores get work.
    per_step = ((B // min_grid_steps) // 8) * 8
    if per_step >= 8:
        tb = min(tb, per_step)
    if tb >= B:
        return B
    return max(8, (tb // 8) * 8)


def attention_forward(x, w, b=None):
    """x: (B, T, D), w: (1, D), b: (1,) (unused: softmax cancels it)  ->  (B, D)"""
    del b  # softmax over T is invariant to adding a constant bias to every score
    B, T, D = x.shape
    vmem_limit, block_budget = _vmem_budget()
    TB = _choose_batch_tile(B, T, D, jnp.dtype(x.dtype).itemsize, block_budget)
    grid = (pl.cdiv(B, TB),)

    out = pl.pallas_call(
        attention_kernel,
        out_shape=jax.ShapeDtypeStruct((B, 1, D), x.dtype),
        grid_spec=pltpu.PrefetchScalarGridSpec(
            num_scalar_prefetch=0,
            grid=grid,
            in_specs=[
                pl.BlockSpec((TB, T, D), lambda i: (i, 0, 0)),   # batch tile of x
                pl.BlockSpec((1, D), lambda i: (0, 0)),          # shared weight
            ],
            out_specs=pl.BlockSpec((TB, 1, D), lambda i: (i, 0, 0)),
        ),
        compiler_params=pltpu.CompilerParams(
            dimension_semantics=("parallel",),        # batch axis shards across TCs
            vmem_limit_bytes=int(vmem_limit),
        ),
    )(x, w)
    return out.reshape(B, D)
    # TODO(synk): for very long sequences (T*D*itemsize near the block budget) add a
    # T grid axis with a flash-style online-softmax accumulator in VMEM scratch so
    # TB stays large independently of T (matters most on v7x's 64 MiB VMEM).


def attention_reference(x, w, b):
    scores = jnp.einsum("btd,od->bto", x, w) + b          # (B, T, 1)
    weights = jax.nn.softmax(scores, axis=1)
    return jnp.sum(x * weights, axis=1)                   # (B, D)


if __name__ == "__main__":
    key = jax.random.PRNGKey(0)
    kx, kw, kb = jax.random.split(key, 3)

    B, T, D = 2, 8, 32                    # batch=2, seq=8, hidden=32
    x = jax.random.normal(kx, (B, T, D), dtype=jnp.float32)

    # Deterministic nn.Linear(dim, 1) parameters (PyTorch-style uniform bound)
    bound = 1.0 / (D ** 0.5)
    w = jax.random.uniform(kw, (1, D), minval=-bound, maxval=bound, dtype=jnp.float32)
    b = jax.random.uniform(kb, (1,), minval=-bound, maxval=bound, dtype=jnp.float32)

    out = attention_forward(x, w, b)
    jax.block_until_ready(out)

    ref = attention_reference(x, w, b)
    assert out.shape == (B, D)
    # MXU contractions accumulate in f32 but multiply f32 inputs at bf16-pass
    # precision at the default precision setting, so compare with a matching tol.
    assert jnp.allclose(out, ref, atol=2e-2, rtol=2e-2), "mismatch vs reference"

    print("KERNEL_OK")
</pallas_src>

<mosaic_0001>
module attributes {stable_mosaic.version = 11 : i64} {
  func.func @attention_kernel(%arg0: i32, %arg1: memref<2x8x32xf32, #tpu.memory_space<vmem>>, %arg2: memref<1x32xf32, #tpu.memory_space<vmem>>, %arg3: memref<2x1x32xf32, #tpu.memory_space<vmem>>) attributes {dimension_semantics = [#tpu.dimension_semantics<parallel>], iteration_bounds = array<i64: 1>, scalar_prefetch = 0 : i64, scratch_operands = 0 : i64, tpu.core_type = #tpu.core_type<tc>, window_params = [{transform_indices = @transform_0, window_bounds = array<i64: 2, 8, 32>}, {pipeline_mode = #tpu.pipeline_mode<synchronous>, transform_indices = @transform_1, window_bounds = array<i64: 1, 32>}, {transform_indices = @transform_2, window_bounds = array<i64: 2, 1, 32>}]} {
    %c0 = arith.constant 0 : index
    %c0_0 = arith.constant 0 : index
    %c0_1 = arith.constant 0 : index
    %0 = vector.load %arg1[%c0, %c0_0, %c0_1] : memref<2x8x32xf32, #tpu.memory_space<vmem>>, vector<2x8x32xf32>
    %c0_2 = arith.constant 0 : index
    %c0_3 = arith.constant 0 : index
    %1 = vector.load %arg2[%c0_2, %c0_3] : memref<1x32xf32, #tpu.memory_space<vmem>>, vector<1x32xf32>
    %2 = vector.shape_cast %1 : vector<1x32xf32> to vector<1x1x32xf32>
    %3 = vector.shape_cast %2 : vector<1x1x32xf32> to vector<1x1x32xf32>
    %4 = vector.broadcast %3 : vector<1x1x32xf32> to vector<2x1x32xf32>
    "tpu.trace_start"() <{level = 10 : i32, message = "bod,btd->bot"}> : () -> ()
    %cst = arith.constant dense<0.000000e+00> : vector<2x1x8xf32>
    %5 = tpu.matmul %4, %0, %cst {dimension_numbers = #tpu.dot_dimension_numbers<[2], [2], [1], [1], [0, 0, 0, 1, 1, 1], [0], [0]>} : vector<2x1x32xf32>, vector<2x8x32xf32>, vector<2x1x8xf32> -> vector<2x1x8xf32>
    "tpu.trace_stop"() : () -> ()
    %cst_4 = arith.constant dense<0xFF800000> : vector<2x1xf32>
    %6 = vector.multi_reduction <maximumf>, %5, %cst_4 [2] : vector<2x1x8xf32> to vector<2x1xf32>
    %7 = vector.shape_cast %6 : vector<2x1xf32> to vector<2x1x1xf32>
    %8 = vector.broadcast %7 : vector<2x1x1xf32> to vector<2x1x8xf32>
    %9 = arith.subf %5, %8 : vector<2x1x8xf32>
    %10 = math.exp %9 : vector<2x1x8xf32>
    %cst_5 = arith.constant dense<0.000000e+00> : vector<2x1xf32>
    %11 = vector.multi_reduction <add>, %10, %cst_5 [2] : vector<2x1x8xf32> to vector<2x1xf32>
    %12 = vector.shape_cast %11 : vector<2x1xf32> to vector<2x1x1xf32>
    %13 = tpu.reciprocal %12 {approx = true} : vector<2x1x1xf32> -> vector<2x1x1xf32>
    %14 = vector.broadcast %13 : vector<2x1x1xf32> to vector<2x1x8xf32>
    %15 = arith.mulf %10, %14 : vector<2x1x8xf32>
    "tpu.trace_start"() <{level = 10 : i32, message = "bot,btd->bod"}> : () -> ()
    %cst_6 = arith.constant dense<0.000000e+00> : vector<2x1x32xf32>
    %16 = tpu.matmul %15, %0, %cst_6 {dimension_numbers = #tpu.dot_dimension_numbers<[2], [1], [1], [2], [0, 0, 0, 1, 1, 2], [0], [0]>} : vector<2x1x8xf32>, vector<2x8x32xf32>, vector<2x1x32xf32> -> vector<2x1x32xf32>
    "tpu.trace_stop"() : () -> ()
    %c0_7 = arith.constant 0 : index
    %c0_8 = arith.constant 0 : index
    %c0_9 = arith.constant 0 : index
    %17 = vector.load %arg3[%c0_7, %c0_8, %c0_9] : memref<2x1x32xf32, #tpu.memory_space<vmem>>, vector<2x1x32xf32>
    tpu.vector_store %arg3[%c0_7, %c0_8, %c0_9], %16 {strides = array<i32>} : memref<2x1x32xf32, #tpu.memory_space<vmem>>, vector<2x1x32xf32>,
    return
  }
  func.func @transform_0(%arg0: i32) -> (i32, i32, i32) {
    %c0_i32 = arith.constant 0 : i32
    %c0_i32_0 = arith.constant 0 : i32
    %c0_i32_1 = arith.constant 0 : i32
    return %arg0, %c0_i32, %c0_i32_0 : i32, i32, i32
  }
  func.func @transform_1(%arg0: i32) -> (i32, i32) {
    %c0_i32 = arith.constant 0 : i32
    %c0_i32_0 = arith.constant 0 : i32
    %c0_i32_1 = arith.constant 0 : i32
    return %c0_i32, %c0_i32_0 : i32, i32
  }
  func.func @transform_2(%arg0: i32) -> (i32, i32, i32) {
    %c0_i32 = arith.constant 0 : i32
    %c0_i32_0 = arith.constant 0 : i32
    %c0_i32_1 = arith.constant 0 : i32
    return %arg0, %c0_i32, %c0_i32_0 : i32, i32, i32
  }
}

</mosaic_0001>

<llo_original>
// kernel: tpu_custom_call.1
$region0: #{tpu_custom_call.1}
  #allocation0 [shape = 'u32[]', space=smem, size = 0x4, offset = 0x4, fixed_abs, tag = 'smem constant byte address 0x4 - core index']
  #allocation1 [shape = 'u32[144,128]{1,0:T(1,128)}', space=vmem, size = 0x12000, scoped, tag = 'internal scratch']
  %s0 = inlined_call_operand.hbm [shape: f32[2,8,32], index: 0, kind: input, shape index: {}]
  %s1 = inlined_call_operand.vmem [shape: f32[1,32], index: 1, kind: input, shape index: {}]
  %s2 = inlined_call_operand.hbm [shape: f32[2,1,32], index: 2, kind: output, shape index: {}]
  %s3 = sld [smem:[#allocation0]]
  $region22: #{tpu_custom_call.1} parent=0
    _
  %s5 = ssub.s32 1, %s3
  %s6 = scalar_select 0, %s5, %s3
  $region1: #{tpu_custom_call.1} parent=0
    #allocation2 [shape = 'u8[8192]{0}', space=vmem, size = 0x2000, scoped, tag = 'input window, operand 0, single buffered']
    #allocation3 [shape = 's32[1]{0}', space=sflag, size = 0x4, scoped, tag = 'scoped memory for tpu_custom_call.1']
    #allocation4 [shape = 's32[1]{0}', space=sflag, size = 0x4, scoped, tag = 'scoped memory for tpu_custom_call.1']
    #allocation5 [shape = 'u8[1024]{0}', space=vmem, size = 0x400, scoped, tag = 'output window, operand 0, single buffered']
    %7 = vsyncpa [#allocation3], 0
    %8 = vsyncpa [#allocation4], 0
    // Predicated region
    $region2: #{tpu_custom_call.1} parent=1 // pred_check
      _
    $region3: #{tpu_custom_call.1} parent=1 // pred_check_branch
      %10 = sbr.rel (0) target = $region5
    $region4: #{tpu_custom_call.1} parent=1 // pred_region
      %s12 = ssub.s32 256, 256
      %13 = vsyncadd [#allocation3], %s12
      %s14 = sshll.u32 [#allocation2], 4
      %s15 = int_to_ptr.vmem [resolvable:$true] %s14
      %20 = dma.hbm_to_vmem [thread:$0]  %s0, 256, %s15, [#allocation3], 128, 128, 8
    $region5: #{tpu_custom_call.1} parent=1 // pred_fallthru
      _
    // Predicated region
    $region6: #{tpu_custom_call.1} parent=1 // pred_check
      _
    $region7: #{tpu_custom_call.1} parent=1 // pred_check_branch
      %22 = sbr.rel (0) target = $region9
    $region8: #{tpu_custom_call.1} parent=1 // pred_region
      _
    $region9: #{tpu_custom_call.1} parent=1 // pred_fallthru
      _
    // Predicated region
    $region10: #{tpu_custom_call.1} parent=1 // pred_check
      _
    $region11: #{tpu_custom_call.1} parent=1 // pred_check_branch
      %24 = sbr.rel (0) target = $region13
    $region12: #{tpu_custom_call.1} parent=1 // pred_region
      %25 = dma.done [#allocation3], 256
    $region13: #{tpu_custom_call.1} parent=1 // pred_fallthru
      _
    %v26 = vld [vmem:[#allocation2] sm:$0xff]
    %v27 = vld [vmem:[#allocation2 + $0x8] sm:$0xff]
    %v28 = vld [vmem:[%s1] sm:$0x1]
    %vm29 = vcmask 261120
    %v31 = vsel %vm29, %v28, 0
    %v34 = vsel %vm29, %v26, 0
    %36 = vmatprep.subr.mxu0 0.0
    %37 = vmatpush1.xpose.msra.mxu0 %v34
    %38 = vmatprep.subr.mxu0 0.0
    %39 = vmatpush1.xpose.msra.mxu0 0.0
    %40 = vmatprep.subr.mxu0 0.0
    %41 = vmatpush1.xpose.msra.mxu0 0.0
    %42 = vmatprep.subr.mxu0 0.0
    %43 = vmatpush1.xpose.msra.mxu0 0.0
    %44 = vmatprep.subr.mxu0 0.0
    %45 = vmatpush1.xpose.msra.mxu0 0.0
    %46 = vmatprep.subr.mxu0 0.0
    %47 = vmatpush1.xpose.msra.mxu0 0.0
    %48 = vmatprep.subr.mxu0 0.0
    %49 = vmatpush1.xpose.msra.mxu0 0.0
    %50 = vmatprep.subr.mxu0 0.0
    %51 = vmatpush1.xpose.msra.mxu0 0.0
    %52 = vmatprep.subr.mxu0 0.0
    %53 = vmatpush1.xpose.msra.mxu0 0.0
    %54 = vmatprep.subr.mxu0 0.0
    %55 = vmatpush1.xpose.msra.mxu0 0.0
    %56 = vmatprep.subr.mxu0 0.0
    %57 = vmatpush1.xpose.msra.mxu0 0.0
    %58 = vmatprep.subr.mxu0 0.0
    %59 = vmatpush1.xpose.msra.mxu0 0.0
    %60 = vmatprep.subr.mxu0 0.0
    %61 = vmatpush1.xpose.msra.mxu0 0.0
    %62 = vmatprep.subr.mxu0 0.0
    %63 = vmatpush1.xpose.msra.mxu0 0.0
    %64 = vmatprep.subr.mxu0 0.0
    %65 = vmatpush1.xpose.msra.mxu0 0.0
    %66 = vmatprep.subr.mxu0 0.0
    %67 = vmatpush1.xpose.msra.mxu0 0.0
    %68 = vmatprep.subr.mxu0 0.0
    %69 = vmatpush1.xpose.msra.mxu0 0.0
    %70 = vmatprep.subr.mxu0 0.0
    %71 = vmatpush1.xpose.msra.mxu0 0.0
    %72 = vmatprep.subr.mxu0 0.0
    %73 = vmatpush1.xpose.msra.mxu0 0.0
    %74 = vmatprep.subr.mxu0 0.0
    %75 = vmatpush1.xpose.msra.mxu0 0.0
    %76 = vmatprep.subr.mxu0 0.0
    %77 = vmatpush1.xpose.msra.mxu0 0.0
    %78 = vmatprep.subr.mxu0 0.0
    %79 = vmatpush1.xpose.msra.mxu0 0.0
    %80 = vmatprep.subr.mxu0 0.0
    %81 = vmatpush1.xpose.msra.mxu0 0.0
    %82 = vmatprep.subr.mxu0 0.0
    %83 = vmatpush1.xpose.msra.mxu0 0.0
    %84 = vmatprep.subr.mxu0 0.0
    %85 = vmatpush1.xpose.msra.mxu0 0.0
    %86 = vmatprep.subr.mxu0 0.0
    %87 = vmatpush1.xpose.msra.mxu0 0.0
    %88 = vmatprep.subr.mxu0 0.0
    %89 = vmatpush1.xpose.msra.mxu0 0.0
    %90 = vmatprep.subr.mxu0 0.0
    %91 = vmatpush1.xpose.msra.mxu0 0.0
    %92 = vmatprep.subr.mxu0 0.0
    %93 = vmatpush1.xpose.msra.mxu0 0.0
    %94 = vmatprep.subr.mxu0 0.0
    %95 = vmatpush1.xpose.msra.mxu0 0.0
    %96 = vmatprep.subr.mxu0 0.0
    %97 = vmatpush1.xpose.msra.mxu0 0.0
    %98 = vmatprep.subr.mxu0 0.0
    %99 = vmatpush1.xpose.msra.mxu0 0.0
    %100 = vmatprep.mubr.f32.mxu0 0.0
    %101 = vmatmul.mubr.f32.gmra.mrb[0].mxu0 %v31
    %v102 = vpop.f32.mrb[0].mxu0
    %v103 = vadd.f32 0.0, %v102
    %v104 = vpop.f32.mrb[0].mxu0
    %105 = vdwg.mxu0
    %v107 = vsel %vm29, %v27, 0
    %109 = vmatprep.subr.mxu0 0.0
    %110 = vmatpush1.xpose.msra.mxu0 %v107
    %111 = vmatprep.subr.mxu0 0.0
    %112 = vmatpush1.xpose.msra.mxu0 0.0
    %113 = vmatprep.subr.mxu0 0.0
    %114 = vmatpush1.xpose.msra.mxu0 0.0
    %115 = vmatprep.subr.mxu0 0.0
    %116 = vmatpush1.xpose.msra.mxu0 0.0
    %117 = vmatprep.subr.mxu0 0.0
    %118 = vmatpush1.xpose.msra.mxu0 0.0
    %119 = vmatprep.subr.mxu0 0.0
    %120 = vmatpush1.xpose.msra.mxu0 0.0
    %121 = vmatprep.subr.mxu0 0.0
    %122 = vmatpush1.xpose.msra.mxu0 0.0
    %123 = vmatprep.subr.mxu0 0.0
    %124 = vmatpush1.xpose.msra.mxu0 0.0
    %125 = vmatprep.subr.mxu0 0.0
    %126 = vmatpush1.xpose.msra.mxu0 0.0
    %127 = vmatprep.subr.mxu0 0.0
    %128 = vmatpush1.xpose.msra.mxu0 0.0
    %129 = vmatprep.subr.mxu0 0.0
    %130 = vmatpush1.xpose.msra.mxu0 0.0
    %131 = vmatprep.subr.mxu0 0.0
    %132 = vmatpush1.xpose.msra.mxu0 0.0
    %133 = vmatprep.subr.mxu0 0.0
    %134 = vmatpush1.xpose.msra.mxu0 0.0
    %135 = vmatprep.subr.mxu0 0.0
    %136 = vmatpush1.xpose.msra.mxu0 0.0
    %137 = vmatprep.subr.mxu0 0.0
    %138 = vmatpush1.xpose.msra.mxu0 0.0
    %139 = vmatprep.subr.mxu0 0.0
    %140 = vmatpush1.xpose.msra.mxu0 0.0
    %141 = vmatprep.subr.mxu0 0.0
    %142 = vmatpush1.xpose.msra.mxu0 0.0
    %143 = vmatprep.subr.mxu0 0.0
    %144 = vmatpush1.xpose.msra.mxu0 0.0
    %145 = vmatprep.subr.mxu0 0.0
    %146 = vmatpush1.xpose.msra.mxu0 0.0
    %147 = vmatprep.subr.mxu0 0.0
    %148 = vmatpush1.xpose.msra.mxu0 0.0
    %149 = vmatprep.subr.mxu0 0.0
    %150 = vmatpush1.xpose.msra.mxu0 0.0
    %151 = vmatprep.subr.mxu0 0.0
    %152 = vmatpush1.xpose.msra.mxu0 0.0
    %153 = vmatprep.subr.mxu0 0.0
    %154 = vmatpush1.xpose.msra.mxu0 0.0
    %155 = vmatprep.subr.mxu0 0.0
    %156 = vmatpush1.xpose.msra.mxu0 0.0
    %157 = vmatprep.subr.mxu0 0.0
    %158 = vmatpush1.xpose.msra.mxu0 0.0
    %159 = vmatprep.subr.mxu0 0.0
    %160 = vmatpush1.xpose.msra.mxu0 0.0
    %161 = vmatprep.subr.mxu0 0.0
    %162 = vmatpush1.xpose.msra.mxu0 0.0
    %163 = vmatprep.subr.mxu0 0.0
    %164 = vmatpush1.xpose.msra.mxu0 0.0
    %165 = vmatprep.subr.mxu0 0.0
    %166 = vmatpush1.xpose.msra.mxu0 0.0
    %167 = vmatprep.subr.mxu0 0.0
    %168 = vmatpush1.xpose.msra.mxu0 0.0
    %169 = vmatprep.subr.mxu0 0.0
    %170 = vmatpush1.xpose.msra.mxu0 0.0
    %171 = vmatprep.subr.mxu0 0.0
    %172 = vmatpush1.xpose.msra.mxu0 0.0
    %173 = vmatprep.mubr.f32.mxu0 0.0
    %174 = vmatmul.mubr.f32.gmra.mrb[0].mxu0 %v31
    %v175 = vpop.f32.mrb[0].mxu0
    %v176 = vadd.f32 0.0, %v175
    %v177 = vpop.f32.mrb[0].mxu0
    %178 = vdwg.mxu0
    %vm179 = vcmask 57344
    %v180 = vsel %vm179, %v103, -inf
    %181 = vmax.xlane.f32.xlu0 %v180
    %v182 = vpop.xlane.xlu0 %181
    %v183 = vsel %vm179, %v176, -inf
    %184 = vmax.xlane.f32.xlu0 %v183
    %v185 = vpop.xlane.xlu0 %184
    %v186 = vsub.f32 %v103, %v182
    %v187 = vsub.f32 %v176, %v185
    %v188 = vmul.f32 %v186, 1.442695
    %v189 = vpow.pop %v188
    %v190 = vmul.f32 %v187, 1.442695
    %v191 = vpow.pop %v190
    %v192 = vsel %vm179, %v189, 0.0
    %193 = vadd.xlane.f32.xlu0 %v192
    %v194 = vpop.xlane.xlu0 %193
    %v195 = vsel %vm179, %v191, 0.0
    %196 = vadd.xlane.f32.xlu0 %v195
    %v197 = vpop.xlane.xlu0 %196
    %v198 = vrcp.pop %v194
    %v199 = vrcp.pop %v197
    %v200 = vmul.f32 %v189, %v198
    %v201 = vmul.f32 %v191, %v199
    %vm202 = vcmask 64512
    %v204 = vsel %vm202, %v200, 0
    %206 = vmatprep.subr.mxu0 0.0
    %207 = vmatpush1.msra.mxu0 %v26
    %208 = vmatprep.subr.mxu0 0.0
    %209 = vmatpush1.msra.mxu0 0.0
    %210 = vmatprep.subr.mxu0 0.0
    %211 = vmatpush1.msra.mxu0 0.0
    %212 = vmatprep.subr.mxu0 0.0
    %213 = vmatpush1.msra.mxu0 0.0
    %214 = vmatprep.subr.mxu0 0.0
    %215 = vmatpush1.msra.mxu0 0.0
    %216 = vmatprep.subr.mxu0 0.0
    %217 = vmatpush1.msra.mxu0 0.0
    %218 = vmatprep.subr.mxu0 0.0
    %219 = vmatpush1.msra.mxu0 0.0
    %220 = vmatprep.subr.mxu0 0.0
    %221 = vmatpush1.msra.mxu0 0.0
    %222 = vmatprep.subr.mxu0 0.0
    %223 = vmatpush1.msra.mxu0 0.0
    %224 = vmatprep.subr.mxu0 0.0
    %225 = vmatpush1.msra.mxu0 0.0
    %226 = vmatprep.subr.mxu0 0.0
    %227 = vmatpush1.msra.mxu0 0.0
    %228 = vmatprep.subr.mxu0 0.0
    %229 = vmatpush1.msra.mxu0 0.0
    %230 = vmatprep.subr.mxu0 0.0
    %231 = vmatpush1.msra.mxu0 0.0
    %232 = vmatprep.subr.mxu0 0.0
    %233 = vmatpush1.msra.mxu0 0.0
    %234 = vmatprep.subr.mxu0 0.0
    %235 = vmatpush1.msra.mxu0 0.0
    %236 = vmatprep.subr.mxu0 0.0
    %237 = vmatpush1.msra.mxu0 0.0
    %238 = vmatprep.subr.mxu0 0.0
    %239 = vmatpush1.msra.mxu0 0.0
    %240 = vmatprep.subr.mxu0 0.0
    %241 = vmatpush1.msra.mxu0 0.0
    %242 = vmatprep.subr.mxu0 0.0
    %243 = vmatpush1.msra.mxu0 0.0
    %244 = vmatprep.subr.mxu0 0.0
    %245 = vmatpush1.msra.mxu0 0.0
    %246 = vmatprep.subr.mxu0 0.0
    %247 = vmatpush1.msra.mxu0 0.0
    %248 = vmatprep.subr.mxu0 0.0
    %249 = vmatpush1.msra.mxu0 0.0
    %250 = vmatprep.subr.mxu0 0.0
    %251 = vmatpush1.msra.mxu0 0.0
    %252 = vmatprep.subr.mxu0 0.0
    %253 = vmatpush1.msra.mxu0 0.0
    %254 = vmatprep.subr.mxu0 0.0
    %255 = vmatpush1.msra.mxu0 0.0
    %256 = vmatprep.subr.mxu0 0.0
    %257 = vmatpush1.msra.mxu0 0.0
    %258 = vmatprep.subr.mxu0 0.0
    %259 = vmatpush1.msra.mxu0 0.0
    %260 = vmatprep.subr.mxu0 0.0
    %261 = vmatpush1.msra.mxu0 0.0
    %262 = vmatprep.subr.mxu0 0.0
    %263 = vmatpush1.msra.mxu0 0.0
    %264 = vmatprep.subr.mxu0 0.0
    %265 = vmatpush1.msra.mxu0 0.0
    %266 = vmatprep.subr.mxu0 0.0
    %267 = vmatpush1.msra.mxu0 0.0
    %268 = vmatprep.subr.mxu0 0.0
    %269 = vmatpush1.msra.mxu0 0.0
    %270 = vmatprep.mubr.f32.mxu0 0.0
    %271 = vmatmul.mubr.f32.gmra.mrb[0].mxu0 %v204
    %v272 = vpop.f32.mrb[0].mxu0
    %v273 = vadd.f32 0.0, %v272
    %v274 = vpop.f32.mrb[0].mxu0
    %275 = vdwg.mxu0
    %v277 = vsel %vm202, %v201, 0
    %279 = vmatprep.subr.mxu0 0.0
    %280 = vmatpush1.msra.mxu0 %v27
    %281 = vmatprep.subr.mxu0 0.0
    %282 = vmatpush1.msra.mxu0 0.0
    %283 = vmatprep.subr.mxu0 0.0
    %284 = vmatpush1.msra.mxu0 0.0
    %285 = vmatprep.subr.mxu0 0.0
    %286 = vmatpush1.msra.mxu0 0.0
    %287 = vmatprep.subr.mxu0 0.0
    %288 = vmatpush1.msra.mxu0 0.0
    %289 = vmatprep.subr.mxu0 0.0
    %290 = vmatpush1.msra.mxu0 0.0
    %291 = vmatprep.subr.mxu0 0.0
    %292 = vmatpush1.msra.mxu0 0.0
    %293 = vmatprep.subr.mxu0 0.0
    %294 = vmatpush1.msra.mxu0 0.0
    %295 = vmatprep.subr.mxu0 0.0
    %296 = vmatpush1.msra.mxu0 0.0
    %297 = vmatprep.subr.mxu0 0.0
    %298 = vmatpush1.msra.mxu0 0.0
    %299 = vmatprep.subr.mxu0 0.0
    %300 = vmatpush1.msra.mxu0 0.0
    %301 = vmatprep.subr.mxu0 0.0
    %302 = vmatpush1.msra.mxu0 0.0
    %303 = vmatprep.subr.mxu0 0.0
    %304 = vmatpush1.msra.mxu0 0.0
    %305 = vmatprep.subr.mxu0 0.0
    %306 = vmatpush1.msra.mxu0 0.0
    %307 = vmatprep.subr.mxu0 0.0
    %308 = vmatpush1.msra.mxu0 0.0
    %309 = vmatprep.subr.mxu0 0.0
    %310 = vmatpush1.msra.mxu0 0.0
    %311 = vmatprep.subr.mxu0 0.0
    %312 = vmatpush1.msra.mxu0 0.0
    %313 = vmatprep.subr.mxu0 0.0
    %314 = vmatpush1.msra.mxu0 0.0
    %315 = vmatprep.subr.mxu0 0.0
    %316 = vmatpush1.msra.mxu0 0.0
    %317 = vmatprep.subr.mxu0 0.0
    %318 = vmatpush1.msra.mxu0 0.0
    %319 = vmatprep.subr.mxu0 0.0
    %320 = vmatpush1.msra.mxu0 0.0
    %321 = vmatprep.subr.mxu0 0.0
    %322 = vmatpush1.msra.mxu0 0.0
    %323 = vmatprep.subr.mxu0 0.0
    %324 = vmatpush1.msra.mxu0 0.0
    %325 = vmatprep.subr.mxu0 0.0
    %326 = vmatpush1.msra.mxu0 0.0
    %327 = vmatprep.subr.mxu0 0.0
    %328 = vmatpush1.msra.mxu0 0.0
    %329 = vmatprep.subr.mxu0 0.0
    %330 = vmatpush1.msra.mxu0 0.0
    %331 = vmatprep.subr.mxu0 0.0
    %332 = vmatpush1.msra.mxu0 0.0
    %333 = vmatprep.subr.mxu0 0.0
    %334 = vmatpush1.msra.mxu0 0.0
    %335 = vmatprep.subr.mxu0 0.0
    %336 = vmatpush1.msra.mxu0 0.0
    %337 = vmatprep.subr.mxu0 0.0
    %338 = vmatpush1.msra.mxu0 0.0
    %339 = vmatprep.subr.mxu0 0.0
    %340 = vmatpush1.msra.mxu0 0.0
    %341 = vmatprep.subr.mxu0 0.0
    %342 = vmatpush1.msra.mxu0 0.0
    %343 = vmatprep.mubr.f32.mxu0 0.0
    %344 = vmatmul.mubr.f32.gmra.mrb[0].mxu0 %v277
    %v345 = vpop.f32.mrb[0].mxu0
    %v346 = vadd.f32 0.0, %v345
    %v347 = vpop.f32.mrb[0].mxu0
    %348 = vdwg.mxu0
    %vm349 = vcmask 253952
    %350 = vst.msk [vmem:[#allocation5] sm:$0x1] %vm349, %v273
    %351 = vst.msk [vmem:[#allocation5 + $0x1] sm:$0x1] %vm349, %v346
    // Predicated region
    $region14: #{tpu_custom_call.1} parent=1 // pred_check
      _
    $region15: #{tpu_custom_call.1} parent=1 // pred_check_branch
      %353 = sbr.rel (0) target = $region17
    $region16: #{tpu_custom_call.1} parent=1 // pred_region
      %s355 = ssub.s32 32, 32
      %356 = vsyncadd [#allocation4], %s355
      %s357 = sshll.u32 [#allocation5], 4
      %s358 = int_to_ptr.vmem [resolvable:$true] %s357
      %363 = dma.vmem_to_hbm [thread:$0]  %s358, 32, %s2, [#allocation4], 16, 16, 1
    $region17: #{tpu_custom_call.1} parent=1 // pred_fallthru
      _
    // Predicated region
    $region18: #{tpu_custom_call.1} parent=1 // pred_check
      _
    $region19: #{tpu_custom_call.1} parent=1 // pred_check_branch
      %365 = sbr.rel (0) target = $region21
    $region20: #{tpu_custom_call.1} parent=1 // pred_region
      %366 = dma.done [#allocation4], 32
    $region21: #{tpu_custom_call.1} parent=1 // pred_fallthru
      _
    %367 = vsyncpa [#allocation3], 1
    %368 = vsyncpa [#allocation4], 1

</llo_original>
